<compile_context>
chip_gen: v5e
topology: v5e:2x2
jax: 0.10.0
libtpu: 0.0.40
codegen_flags: <defaults>
</compile_context>

<pallas_src>
import functools

import jax
import jax.numpy as jnp
from jax import lax
from jax.experimental import pallas as pl
from jax.experimental.pallas import tpu as pltpu

_INT32_MIN = -(2 ** 31)


# ----------------------------------------------------------------------------
# Kernel 1: feat0 = g_func( bn0(feat) ++ xyz )   (channels-major, bn0 folded)
#   One MXU matmul [Cexp, F] @ [F, T1]; the depth-3 xyz contribution and the
#   folded bn0 shift ride on the VPU.  feat0 is stored as bf16.
# ----------------------------------------------------------------------------
def _feat0_kernel(feat_ref, xyzt_ref, wgf_ref, wgx_ref, bias_ref, feat0_ref):
    f = feat_ref[0]                                     # [F, T1]  (native torch layout)
    xt = xyzt_ref[0]                                    # [3, T1]

    f0 = jnp.dot(wgf_ref[...], f,
                 preferred_element_type=jnp.float32)    # [Cexp, T1] (bn0 scale folded)

    wgx = wgx_ref[...]                                  # [Cexp, 3]
    for c in range(3):                                  # depth-3 contraction -> VPU
        f0 = f0 + wgx[:, c:c + 1] * xt[c:c + 1, :]

    f0 = f0 + bias_ref[...]                             # [Cexp, 1] (bn0 shift folded)
    feat0_ref[0] = f0.astype(feat0_ref.dtype)


# ----------------------------------------------------------------------------
# Kernel 2 (fused, per (batch, query-tile)):
#   - per-row-shift-invariant neighbour keys on the VPU (f32, no O(N^2) HBM)
#   - packed sortable-int keys  ->  ONE lane max-reduce per top-k step
#   - per-k thin bf16 MXU gather [Cexp,N] x [N,TQ] folded into a running max
#   - rel = max_k(feat0[nbr]) - feat0[q], then the pre-summed h_func matmul
# ----------------------------------------------------------------------------
def _group_kernel(xyzt_ref, xyzq_ref, feat0_ref, whs_ref, out_ref, *, k, tq, n):
    xt = xyzt_ref[0]                                    # [3, N]    f32 keys
    xq = xyzq_ref[0]                                    # [TQ, 3]   f32 queries
    f0 = feat0_ref[0]                                   # [Cexp, N] bf16

    # --- bknn keys:  negdist = 2 q.x - ||x||^2 - ||q||^2  (VPU, f32) --------
    sq_all = jnp.sum(xt * xt, axis=0, keepdims=True)    # [1, N]
    sq_q = jnp.sum(xq * xq, axis=1, keepdims=True)      # [TQ, 1]
    xq2 = xq + xq                                       # fold the 2x on the tiny tile
    negdist = (xq2[:, 0:1] * xt[0:1, :] +
               xq2[:, 1:2] * xt[1:2, :] +
               xq2[:, 2:3] * xt[2:3, :])
    negdist = negdist - sq_q - sq_all                   # [TQ, N]

    # --- packed sortable-int keys: high bits = distance order, low
    #     ceil(log2 N) bits = (N-1-col) -> strict order, single reduce per k.
    nbits = max((n - 1).bit_length(), 1)
    bits = pltpu.bitcast(negdist, jnp.int32)
    skey = jnp.where(bits < 0, bits ^ jnp.int32(0x7FFFFFFF), bits)
    cols = lax.broadcasted_iota(jnp.int32, (tq, n), 1)
    packed = (skey & jnp.int32(-(1 << nbits))) | (jnp.int32(n - 1) - cols)

    # --- top-k + gather + running max (no K-stack of masks, no concat) ------
    maxed = None
    for _ in range(k):
        m = jnp.max(packed, axis=-1, keepdims=True)                    # [TQ, 1]
        hit = packed == m                                              # one True/row
        gk = lax.dot_general(f0, hit.astype(jnp.bfloat16),
                             (((1,), (1,)), ((), ())),
                             preferred_element_type=jnp.float32)       # [Cexp, TQ]
        maxed = gk if maxed is None else jnp.maximum(maxed, gk)
        packed = jnp.where(hit, jnp.int32(_INT32_MIN), packed)         # invalidate

    # --- relative feature + h_func (M identical groups pre-summed) ----------
    qs = pl.multiple_of(pl.program_id(1) * tq, tq)
    f0_q = feat0_ref[0, :, pl.ds(qs, tq)].astype(jnp.float32)          # [Cexp, TQ]
    rel = maxed - f0_q
    out_ref[0] = jnp.dot(whs_ref[...], rel,
                         preferred_element_type=jnp.float32).astype(out_ref.dtype)


# ----------------------------------------------------------------------------
# Wrapper
# ----------------------------------------------------------------------------
def _pick_stream_tile(n, cands=(2048, 1024, 512, 256, 128)):
    for t in cands:
        if n >= t and n % t == 0:
            return t
    return n


def surface_conv_forward(xyz, feat, params, *, k, M, tq=None):
    B, N, _ = xyz.shape                    # xyz: [B, N, 3]
    _, F, _ = feat.shape                   # feat: [B, F, N]  (channels-first)
    g_w = params["g_w"]                    # [Cexp, F+3]     (nn.Linear weight, [out, in])
    h_w = params["h_w"]                    # [channels, M*Cexp]
    gamma = params["bn0_gamma"]            # [F]
    beta = params["bn0_beta"]              # [F]
    Cexp = g_w.shape[0]
    channels = h_w.shape[0]
    assert k <= N, "k must not exceed the number of points"

    # ---- bn0 training-mode batch stats, folded into the g_func weights -----
    mean = jnp.mean(feat, axis=(0, 2))
    var = jnp.mean(jnp.square(feat), axis=(0, 2)) - jnp.square(mean)
    scale = gamma * lax.rsqrt(var + 1e-5)                   # [F]
    shift = beta - mean * scale                             # [F]
    wgf_scaled = g_w[:, :F] * scale[None, :]                # bn0 scale folded
    wgx = g_w[:, F:]                                        # [Cexp, 3]
    bias_g = (g_w[:, :F] @ shift)[:, None]                  # [Cexp, 1] bn0 shift folded

    # ---- h_func: all M groups identical -> sum the M weight chunks ---------
    wh_sum = jnp.sum(h_w.reshape(channels, M, Cexp), axis=1)    # [channels, Cexp]

    xyzt = jnp.transpose(xyz, (0, 2, 1))                    # [B, 3, N] channels-major keys

    # ---- Kernel 1: bandwidth-bound feat0 stream, large tile ----------------
    t1 = _pick_stream_tile(N)
    feat0 = pl.pallas_call(
        _feat0_kernel,
        out_shape=jax.ShapeDtypeStruct((B, Cexp, N), jnp.bfloat16),
        grid=(B, N // t1),
        in_specs=[
            pl.BlockSpec((1, F, t1), lambda b, i: (b, 0, i)),
            pl.BlockSpec((1, 3, t1), lambda b, i: (b, 0, i)),
            pl.BlockSpec((Cexp, F), lambda b, i: (0, 0)),
            pl.BlockSpec((Cexp, 3), lambda b, i: (0, 0)),
            pl.BlockSpec((Cexp, 1), lambda b, i: (0, 0)),
        ],
        out_specs=pl.BlockSpec((1, Cexp, t1), lambda b, i: (b, 0, i)),
        compiler_params=pltpu.CompilerParams(
            dimension_semantics=("parallel", "parallel"),
            vmem_limit_bytes=32 * 1024 * 1024),
    )(feat, xyzt, wgf_scaled, wgx, bias_g)

    # ---- Kernel 2: fused kNN + gather + h_func ------------------------------
    # tq=128 keeps v7x (64 MiB/TC) comfortable; pass tq=256 on v6e if desired.
    if tq is None:
        tq = 128 if (N > 128 and N % 128 == 0) else N
    assert N % tq == 0 and (tq == N or tq % 128 == 0)
    nq = N // tq

    cost = pl.CostEstimate(
        flops=int(2 * B * N * N * k * Cexp                  # per-k gather matmuls
                  + 2 * B * N * channels * Cexp             # h_func matmuls
                  + 12 * B * N * N),                        # dist + top-k VPU work
        transcendentals=0,
        bytes_accessed=int(B * (2 * Cexp * N                # feat0 (bf16, once/batch)
                                + 4 * 3 * N                 # xyzt keys
                                + 4 * 3 * N                 # xyz query tiles
                                + 4 * channels * N)))       # output

    out = pl.pallas_call(
        functools.partial(_group_kernel, k=k, tq=tq, n=N),
        out_shape=jax.ShapeDtypeStruct((B, channels, N), jnp.float32),
        grid=(B, nq),                                        # q innermost: keys/feat0 stay resident
        in_specs=[
            pl.BlockSpec((1, 3, N), lambda b, q: (b, 0, 0)),      # keys (resident per b)
            pl.BlockSpec((1, tq, 3), lambda b, q: (b, q, 0)),     # query tile
            pl.BlockSpec((1, Cexp, N), lambda b, q: (b, 0, 0)),   # feat0 (resident per b)
            pl.BlockSpec((channels, Cexp), lambda b, q: (0, 0)),  # summed h weights
        ],
        out_specs=pl.BlockSpec((1, channels, tq), lambda b, q: (b, 0, q)),
        compiler_params=pltpu.CompilerParams(
            dimension_semantics=("parallel", "parallel"),
            vmem_limit_bytes=48 * 1024 * 1024),
        cost_estimate=cost,
    )(xyzt, xyz, feat0, wh_sum)

    return out                                              # [B, channels, N]


# ----------------------------------------------------------------------------
# Pure-JAX f32 reference of the PyTorch forward (for validation only).
# ----------------------------------------------------------------------------
def _reference_forward(xyz, feat, params, *, k, M):
    hi = lax.Precision.HIGHEST
    g_w, h_w = params["g_w"], params["h_w"]
    mean = jnp.mean(feat, axis=(0, 2), keepdims=True)
    var = jnp.mean(jnp.square(feat), axis=(0, 2), keepdims=True) - jnp.square(mean)
    fn = ((feat - mean) * lax.rsqrt(var + 1e-5) * params["bn0_gamma"][None, :, None]
          + params["bn0_beta"][None, :, None])
    xt = jnp.transpose(xyz, (0, 2, 1))                              # [B, 3, N]
    cat = jnp.concatenate([fn, xt], axis=1)                         # [B, F+3, N]
    feat0 = jnp.einsum("oc,bcn->bon", g_w, cat, precision=hi)       # [B, Cexp, N]

    inner = 2.0 * jnp.sum(xt[:, :, :, None] * xt[:, :, None, :], axis=1)   # [B, N, N]
    xx = jnp.sum(xt * xt, axis=1)                                   # [B, N]
    negdist = inner - xx[:, :, None] - xx[:, None, :]
    idx = lax.top_k(negdist, k)[1]                                  # [B, N, k]

    f0_t = jnp.transpose(feat0, (0, 2, 1))                          # [B, N, Cexp]
    grp = jax.vmap(lambda f, i: f[i])(f0_t, idx)                    # [B, N, k, Cexp]
    rel = jnp.max(grp, axis=2) - f0_t                               # [B, N, Cexp]
    rel_cat = jnp.concatenate([rel] * M, axis=-1)                   # [B, N, M*Cexp]
    return jnp.einsum("om,bnm->bon", h_w, rel_cat, precision=hi)    # [B, channels, N]


# ----------------------------------------------------------------------------
if __name__ == "__main__":
    B, N, channels, k, M = 2, 32, 16, 8, 2
    dim_expand = 0.5
    Cexp = int(channels * dim_expand)

    key = jax.random.PRNGKey(0)
    k_xyz, k_feat, k_g, k_h = jax.random.split(key, 4)

    xyz = jax.random.normal(k_xyz, (B, N, 3), dtype=jnp.float32)
    feat = jax.random.normal(k_feat, (B, channels, N), dtype=jnp.float32)

    # Deterministic nn.Linear-style init (weights kept in native [out, in]).
    bg = 1.0 / jnp.sqrt(jnp.float32(channels + 3))
    g_w = jax.random.uniform(k_g, (Cexp, channels + 3), jnp.float32, -bg, bg)
    bh = 1.0 / jnp.sqrt(jnp.float32(M * Cexp))
    h_w = jax.random.uniform(k_h, (channels, M * Cexp), jnp.float32, -bh, bh)

    params = {
        "g_w": g_w,
        "h_w": h_w,
        "bn0_gamma": jnp.ones((channels,), jnp.float32),
        "bn0_beta": jnp.zeros((channels,), jnp.float32),
    }

    out = surface_conv_forward(xyz, feat, params, k=k, M=M)
    out = jax.block_until_ready(out)

    assert out.shape == (B, channels, N), out.shape
    assert bool(jnp.all(jnp.isfinite(out)))

    ref = _reference_forward(xyz, feat, params, k=k, M=M)
    err = float(jnp.max(jnp.abs(out - ref)))
    assert err < 5e-2, f"max abs error vs reference: {err}"

    print("KERNEL_OK")
</pallas_src>

<mosaic_0001>
module attributes {stable_mosaic.version = 11 : i64} {
  func.func @_feat0_kernel(%arg0: i32, %arg1: i32, %arg2: memref<1x16x32xf32, #tpu.memory_space<vmem>>, %arg3: memref<1x3x32xf32, #tpu.memory_space<vmem>>, %arg4: memref<8x16xf32, #tpu.memory_space<vmem>>, %arg5: memref<8x3xf32, #tpu.memory_space<vmem>>, %arg6: memref<8x1xf32, #tpu.memory_space<vmem>>, %arg7: memref<1x8x32xbf16, #tpu.memory_space<vmem>>) attributes {dimension_semantics = [#tpu.dimension_semantics<parallel>, #tpu.dimension_semantics<parallel>], iteration_bounds = array<i64: 2, 1>, scalar_prefetch = 0 : i64, scratch_operands = 0 : i64, tpu.core_type = #tpu.core_type<tc>, window_params = [{transform_indices = @transform_0, window_bounds = array<i64: 1, 16, 32>}, {transform_indices = @transform_1, window_bounds = array<i64: 1, 3, 32>}, {pipeline_mode = #tpu.pipeline_mode<synchronous>, transform_indices = @transform_2, window_bounds = array<i64: 8, 16>}, {pipeline_mode = #tpu.pipeline_mode<synchronous>, transform_indices = @transform_3, window_bounds = array<i64: 8, 3>}, {pipeline_mode = #tpu.pipeline_mode<synchronous>, transform_indices = @transform_4, window_bounds = array<i64: 8, 1>}, {transform_indices = @transform_5, window_bounds = array<i64: 1, 8, 32>}]} {
    %c0 = arith.constant 0 : index
    %c0_0 = arith.constant 0 : index
    %c0_1 = arith.constant 0 : index
    %0 = vector.load %arg2[%c0, %c0_0, %c0_1] : memref<1x16x32xf32, #tpu.memory_space<vmem>>, vector<1x16x32xf32>
    %1 = vector.shape_cast %0 : vector<1x16x32xf32> to vector<16x32xf32>
    %c0_2 = arith.constant 0 : index
    %c0_3 = arith.constant 0 : index
    %c0_4 = arith.constant 0 : index
    %2 = vector.load %arg3[%c0_2, %c0_3, %c0_4] : memref<1x3x32xf32, #tpu.memory_space<vmem>>, vector<1x3x32xf32>
    %3 = vector.shape_cast %2 : vector<1x3x32xf32> to vector<3x32xf32>
    %c0_5 = arith.constant 0 : index
    %c0_6 = arith.constant 0 : index
    %4 = vector.load %arg4[%c0_5, %c0_6] : memref<8x16xf32, #tpu.memory_space<vmem>>, vector<8x16xf32>
    %cst = arith.constant dense<0.000000e+00> : vector<8x32xf32>
    %5 = tpu.matmul %4, %1, %cst {dimension_numbers = #tpu.dot_dimension_numbers<[1], [0], [0], [1], [0, 0, 1, 1], [], []>} : vector<8x16xf32>, vector<16x32xf32>, vector<8x32xf32> -> vector<8x32xf32>
    %c0_7 = arith.constant 0 : index
    %c0_8 = arith.constant 0 : index
    %6 = vector.load %arg5[%c0_7, %c0_8] : memref<8x3xf32, #tpu.memory_space<vmem>>, vector<8x3xf32>
    %7 = vector.extract_strided_slice %6 {offsets = [0, 0], sizes = [8, 1], strides = [1, 1]} : vector<8x3xf32> to vector<8x1xf32>
    %8 = vector.extract_strided_slice %3 {offsets = [0, 0], sizes = [1, 32], strides = [1, 1]} : vector<3x32xf32> to vector<1x32xf32>
    %9 = vector.broadcast %7 : vector<8x1xf32> to vector<8x32xf32>
    %10 = vector.broadcast %8 : vector<1x32xf32> to vector<8x32xf32>
    %11 = arith.mulf %9, %10 : vector<8x32xf32>
    %12 = arith.addf %5, %11 : vector<8x32xf32>
    %13 = vector.extract_strided_slice %6 {offsets = [0, 1], sizes = [8, 1], strides = [1, 1]} : vector<8x3xf32> to vector<8x1xf32>
    %14 = vector.extract_strided_slice %3 {offsets = [1, 0], sizes = [1, 32], strides = [1, 1]} : vector<3x32xf32> to vector<1x32xf32>
    %15 = vector.broadcast %13 : vector<8x1xf32> to vector<8x32xf32>
    %16 = vector.broadcast %14 : vector<1x32xf32> to vector<8x32xf32>
    %17 = arith.mulf %15, %16 : vector<8x32xf32>
    %18 = arith.addf %12, %17 : vector<8x32xf32>
    %19 = vector.extract_strided_slice %6 {offsets = [0, 2], sizes = [8, 1], strides = [1, 1]} : vector<8x3xf32> to vector<8x1xf32>
    %20 = vector.extract_strided_slice %3 {offsets = [2, 0], sizes = [1, 32], strides = [1, 1]} : vector<3x32xf32> to vector<1x32xf32>
    %21 = vector.broadcast %19 : vector<8x1xf32> to vector<8x32xf32>
    %22 = vector.broadcast %20 : vector<1x32xf32> to vector<8x32xf32>
    %23 = arith.mulf %21, %22 : vector<8x32xf32>
    %24 = arith.addf %18, %23 : vector<8x32xf32>
    %c0_9 = arith.constant 0 : index
    %c0_10 = arith.constant 0 : index
    %25 = vector.load %arg6[%c0_9, %c0_10] : memref<8x1xf32, #tpu.memory_space<vmem>>, vector<8x1xf32>
    %26 = vector.broadcast %25 : vector<8x1xf32> to vector<8x32xf32>
    %27 = arith.addf %24, %26 : vector<8x32xf32>
    %28 = arith.truncf %27 : vector<8x32xf32> to vector<8x32xbf16>
    %c0_11 = arith.constant 0 : index
    %c0_12 = arith.constant 0 : index
    %c0_13 = arith.constant 0 : index
    %29 = vector.load %arg7[%c0_11, %c0_12, %c0_13] : memref<1x8x32xbf16, #tpu.memory_space<vmem>>, vector<1x8x32xbf16>
    %30 = vector.shape_cast %29 : vector<1x8x32xbf16> to vector<8x32xbf16>
    %31 = vector.shape_cast %28 : vector<8x32xbf16> to vector<1x8x32xbf16>
    tpu.vector_store %arg7[%c0_11, %c0_12, %c0_13], %31 {strides = array<i32>} : memref<1x8x32xbf16, #tpu.memory_space<vmem>>, vector<1x8x32xbf16>,
    return
  }
  func.func @transform_0(%arg0: i32, %arg1: i32) -> (i32, i32, i32) {
    %c0_i32 = arith.constant 0 : i32
    %c0_i32_0 = arith.constant 0 : i32
    return %arg0, %c0_i32, %arg1 : i32, i32, i32
  }
  func.func @transform_1(%arg0: i32, %arg1: i32) -> (i32, i32, i32) {
    %c0_i32 = arith.constant 0 : i32
    %c0_i32_0 = arith.constant 0 : i32
    return %arg0, %c0_i32, %arg1 : i32, i32, i32
  }
  func.func @transform_2(%arg0: i32, %arg1: i32) -> (i32, i32) {
    %c0_i32 = arith.constant 0 : i32
    %c0_i32_0 = arith.constant 0 : i32
    %c0_i32_1 = arith.constant 0 : i32
    return %c0_i32, %c0_i32_0 : i32, i32
  }
  func.func @transform_3(%arg0: i32, %arg1: i32) -> (i32, i32) {
    %c0_i32 = arith.constant 0 : i32
    %c0_i32_0 = arith.constant 0 : i32
    %c0_i32_1 = arith.constant 0 : i32
    return %c0_i32, %c0_i32_0 : i32, i32
  }
  func.func @transform_4(%arg0: i32, %arg1: i32) -> (i32, i32) {
    %c0_i32 = arith.constant 0 : i32
    %c0_i32_0 = arith.constant 0 : i32
    %c0_i32_1 = arith.constant 0 : i32
    return %c0_i32, %c0_i32_0 : i32, i32
  }
  func.func @transform_5(%arg0: i32, %arg1: i32) -> (i32, i32, i32) {
    %c0_i32 = arith.constant 0 : i32
    %c0_i32_0 = arith.constant 0 : i32
    return %arg0, %c0_i32, %arg1 : i32, i32, i32
  }
}

</mosaic_0001>

<llo_original>
// kernel: tpu_custom_call.1
$region0: #{tpu_custom_call.1}
  #allocation0 [shape = 'u32[]', space=smem, size = 0x4, offset = 0x4, fixed_abs, tag = 'smem constant byte address 0x4 - core index']
  #allocation1 [shape = 'u32[72,128]{1,0:T(1,128)}', space=vmem, size = 0x9000, scoped, tag = 'internal scratch']
  %s0 = inlined_call_operand.hbm [shape: f32[2,16,32], index: 0, kind: input, shape index: {}]
  %s1 = inlined_call_operand.vmem [shape: f32[2,3,32], index: 1, kind: input, shape index: {}]
  %s2 = inlined_call_operand.vmem [shape: f32[8,16], index: 2, kind: input, shape index: {}]
  %s3 = inlined_call_operand.vmem [shape: f32[8,3], index: 3, kind: input, shape index: {}]
  %s4 = inlined_call_operand.vmem [shape: f32[8,1], index: 4, kind: input, shape index: {}]
  %s5 = inlined_call_operand.hbm [shape: bf16[2,8,32], index: 5, kind: output, shape index: {}]
  %s6 = sld [smem:[#allocation0]]
  $region57: #{tpu_custom_call.1} parent=0
    _
  %s8 = ssub.s32 1, %s6
  %s9 = scalar_select 0, %s8, %s6
  $region1: #{tpu_custom_call.1} parent=0
    #allocation2 [shape = 'u8[16384]{0}', space=vmem, size = 0x4000, scoped, tag = 'input window, operand 0']
    #allocation3 [shape = 's32[2]{0}', space=sflag, size = 0x8, scoped, tag = 'scoped memory for tpu_custom_call.1']
    #allocation4 [shape = 's32[2]{0}', space=sflag, size = 0x8, scoped, tag = 'scoped memory for tpu_custom_call.1']
    #allocation5 [shape = 'u8[4096]{0}', space=vmem, size = 0x1000, scoped, tag = 'output window, operand 0']
    %10 = vsyncpa [#allocation3], 0
    %s11 = scalar_lea.sflag [#allocation3], 1
    %12 = vsyncpa %s11, 0
    %13 = vsyncpa [#allocation4], 0
    %s14 = scalar_lea.sflag [#allocation4], 1
    %15 = vsyncpa %s14, 0
    loop: start=0, step=1, limit=4
    $region2: #{tpu_custom_call.1} parent=1 // loop_pre_header
      _
    $region3: #{tpu_custom_call.1} parent=1 // loop_header
      %s17 = sphi 0, %s21
      %p18 = scmp.ge.s32.totalorder %s17, 4
      %s24 = sphi 0, %s36
      %s25 = sphi 0, %s32
      %s26 = sphi 0, %s24
      %s27 = sphi 0, %s25
      %s28 = sphi 0, %s26
      %s29 = sphi 0, %s27
      %s41 = sphi 0, %s43
      %s44 = sphi 0, %s41
      %s45 = sphi 0, %s44
      %s61 = sphi 0, %s45
      %s69 = sphi 0, %s71
      %s72 = sphi 0, %s69
      %s73 = sphi 0, %s72
      %s89 = sphi 0, %s73
      %s93 = sphi 0, %s93
      %s95 = sphi 0, %s93
      %s96 = sphi 0, %s95
      %s110 = sphi 0, %s96
      %s114 = sphi 0, %s114
      %s116 = sphi 0, %s114
      %s117 = sphi 0, %s116
      %s131 = sphi 0, %s117
      %s135 = sphi 0, %s135
      %s137 = sphi 0, %s135
      %s138 = sphi 0, %s137
      %s152 = sphi 0, %s138
      %s160 = sphi 0, %s162
      %s163 = sphi 0, %s160
      %s164 = sphi 0, %s163
      %s180 = sphi 0, %s164
    $region4: #{tpu_custom_call.1} parent=1 // loop_header_branch
      %20 = sbr.rel (%p18) target = $region8
    $region5: #{tpu_custom_call.1} parent=1 // loop_body
      %s22 = ssub.s32 %s17, 1
      %s23 = ssub.s32 %s17, 2
      %s30 = sadd.s32 1, %s25
      %p31 = scmp.ge.s32.totalorder %s30, 1
      %s32 = scalar_select %p31, 0, %s30
      %s33 = sadd.s32 1, %s24
      %s34 = scalar_select %p31, %s33, %s24
      %p35 = scmp.ge.s32.totalorder %s34, 2
      %s36 = scalar_select %p35, 0, %s34
      %s37 = ssub.s32 %s24, %s36
      %s38 = ssub.s32 %s25, %s32
      %s39 = sor.u32 %s37, %s38
      %p40 = scmp.eq.s32.totalorder %s39, 0
      %s42 = sadd.s32 %s41, 1
      %s43 = scalar_select %p40, %s41, %s42
      %p46 = pneg %p40
      %p47 = scmp.eq.s32.totalorder %s17, 1
      %p48 = por %p46, %p47
      %p49 = scmp.ne.s32.totalorder %s41, %s44
      %p50 = scmp.eq.s32.totalorder %s17, 0
      %p51 = por %p49, %p50
      %p52 = scmp.ne.s32.totalorder %s41, %s44
      %p53 = scmp.eq.s32.totalorder %s22, 1
      %p54 = por %p52, %p53
      %p55 = scmp.ne.s32.totalorder %s44, %s45
      %p56 = scmp.eq.s32.totalorder %s22, 0
      %p57 = por %p55, %p56
      %p58 = scmp.ne.s32.totalorder %s44, %s45
      %p59 = scmp.eq.s32.totalorder %s23, 1
      %p60 = por %p58, %p59
      %p62 = scmp.ne.s32.totalorder %s45, %s61
      %p63 = scmp.eq.s32.totalorder %s23, 0
      %p64 = por %p62, %p63
      %s65 = ssub.s32 %s24, %s36
      %s66 = ssub.s32 %s25, %s32
      %s67 = sor.u32 %s65, %s66
      %p68 = scmp.eq.s32.totalorder %s67, 0
      %s70 = sadd.s32 %s69, 1
      %s71 = scalar_select %p68, %s69, %s70
      %p74 = pneg %p68
      %p75 = scmp.eq.s32.totalorder %s17, 1
      %p76 = por %p74, %p75
      %p77 = scmp.ne.s32.totalorder %s69, %s72
      %p78 = scmp.eq.s32.totalorder %s17, 0
      %p79 = por %p77, %p78
      %p80 = scmp.ne.s32.totalorder %s69, %s72
      %p81 = scmp.eq.s32.totalorder %s22, 1
      %p82 = por %p80, %p81
      %p83 = scmp.ne.s32.totalorder %s72, %s73
      %p84 = scmp.eq.s32.totalorder %s22, 0
      %p85 = por %p83, %p84
      %p86 = scmp.ne.s32.totalorder %s72, %s73
      %p87 = scmp.eq.s32.totalorder %s23, 1
      %p88 = por %p86, %p87
      %p90 = scmp.ne.s32.totalorder %s73, %s89
      %p91 = scmp.eq.s32.totalorder %s23, 0
      %p92 = por %p90, %p91
      %s94 = sadd.s32 %s93, 1
      %p97 = scmp.eq.s32.totalorder %s17, 1
      %p98 = scmp.ne.s32.totalorder %s93, %s95
      %p99 = scmp.eq.s32.totalorder %s17, 0
      %p100 = por %p98, %p99
      %p101 = scmp.ne.s32.totalorder %s93, %s95
      %p102 = scmp.eq.s32.totalorder %s22, 1
      %p103 = por %p101, %p102
      %p104 = scmp.ne.s32.totalorder %s95, %s96
      %p105 = scmp.eq.s32.totalorder %s22, 0
      %p106 = por %p104, %p105
      %p107 = scmp.ne.s32.totalorder %s95, %s96
      %p108 = scmp.eq.s32.totalorder %s23, 1
      %p109 = por %p107, %p108
      %p111 = scmp.ne.s32.totalorder %s96, %s110
      %p112 = scmp.eq.s32.totalorder %s23, 0
      %p113 = por %p111, %p112
      %s115 = sadd.s32 %s114, 1
      %p118 = scmp.eq.s32.totalorder %s17, 1
      %p119 = scmp.ne.s32.totalorder %s114, %s116
      %p120 = scmp.eq.s32.totalorder %s17, 0
      %p121 = por %p119, %p120
      %p122 = scmp.ne.s32.totalorder %s114, %s116
      %p123 = scmp.eq.s32.totalorder %s22, 1
      %p124 = por %p122, %p123
      %p125 = scmp.ne.s32.totalorder %s116, %s117
      %p126 = scmp.eq.s32.totalorder %s22, 0
      %p127 = por %p125, %p126
      %p128 = scmp.ne.s32.totalorder %s116, %s117
      %p129 = scmp.eq.s32.totalorder %s23, 1
      %p130 = por %p128, %p129
      %p132 = scmp.ne.s32.totalorder %s117, %s131
      %p133 = scmp.eq.s32.totalorder %s23, 0
      %p134 = por %p132, %p133
      %s136 = sadd.s32 %s135, 1
      %p139 = scmp.eq.s32.totalorder %s17, 1
      %p140 = scmp.ne.s32.totalorder %s135, %s137
      %p141 = scmp.eq.s32.totalorder %s17, 0
      %p142 = por %p140, %p141
      %p143 = scmp.ne.s32.totalorder %s135, %s137
      %p144 = scmp.eq.s32.totalorder %s22, 1
      %p145 = por %p143, %p144
      %p146 = scmp.ne.s32.totalorder %s137, %s138
      %p147 = scmp.eq.s32.totalorder %s22, 0
      %p148 = por %p146, %p147
      %p149 = scmp.ne.s32.totalorder %s137, %s138
      %p150 = scmp.eq.s32.totalorder %s23, 1
      %p151 = por %p149, %p150
      %p153 = scmp.ne.s32.totalorder %s138, %s152
      %p154 = scmp.eq.s32.totalorder %s23, 0
      %p155 = por %p153, %p154
      %s156 = ssub.s32 %s24, %s36
      %s157 = ssub.s32 %s25, %s32
      %s158 = sor.u32 %s156, %s157
      %p159 = scmp.eq.s32.totalorder %s158, 0
      %s161 = sadd.s32 %s160, 1
      %s162 = scalar_select %p159, %s160, %s161
      %p165 = pneg %p159
      %p166 = scmp.eq.s32.totalorder %s17, 1
      %p167 = por %p165, %p166
      %p168 = scmp.ne.s32.totalorder %s160, %s163
      %p169 = scmp.eq.s32.totalorder %s17, 0
      %p170 = por %p168, %p169
      %p171 = scmp.ne.s32.totalorder %s160, %s163
      %p172 = scmp.eq.s32.totalorder %s22, 1
      %p173 = por %p171, %p172
      %p174 = scmp.ne.s32.totalorder %s163, %s164
      %p175 = scmp.eq.s32.totalorder %s22, 0
      %p176 = por %p174, %p175
      %p177 = scmp.ne.s32.totalorder %s163, %s164
      %p178 = scmp.eq.s32.totalorder %s23, 1
      %p179 = por %p177, %p178
      %p181 = scmp.ne.s32.totalorder %s164, %s180
      %p182 = scmp.eq.s32.totalorder %s23, 0
      %p183 = por %p181, %p182
      %p184 = scmp.le.s32.totalorder 1, %s17
      %p185 = scmp.lt.s32.totalorder %s17, 3
      %p186 = pnand %p184, %p185
      %p187 = pneg %p186
      // Predicated region
      $region9: #{tpu_custom_call.1} parent=5 // pred_check
        _
      $region10: #{tpu_custom_call.1} parent=5 // pred_check_branch
        %189 = sbr.rel (%p186) target = $region12
      $region11: #{tpu_custom_call.1} parent=5 // pred_region
        %s190 = ssub.s32 %s17, 1
        // Predicated region
        $region13: #{tpu_custom_call.1} parent=11 // pred_check
          %p191 = pneg %p106
        $region14: #{tpu_custom_call.1} parent=11 // pred_check_branch
          %193 = sbr.rel (%p191) target = $region16
        $region15: #{tpu_custom_call.1} parent=11 // pred_region
          _
        $region16: #{tpu_custom_call.1} parent=11 // pred_fallthru
          _
        // Predicated region
        $region17: #{tpu_custom_call.1} parent=11 // pred_check
          %p194 = pneg %p127
        $region18: #{tpu_custom_call.1} parent=11 // pred_check_branch
          %196 = sbr.rel (%p194) target = $region20
        $region19: #{tpu_custom_call.1} parent=11 // pred_region
          _
        $region20: #{tpu_custom_call.1} parent=11 // pred_fallthru
          _
        // Predicated region
        $region21: #{tpu_custom_call.1} parent=11 // pred_check
          %p197 = pneg %p148
        $region22: #{tpu_custom_call.1} parent=11 // pred_check_branch
          %199 = sbr.rel (%p197) target = $region24
        $region23: #{tpu_custom_call.1} parent=11 // pred_region
          _
        $region24: #{tpu_custom_call.1} parent=11 // pred_fallthru
          _
      $region12: #{tpu_custom_call.1} parent=5 // pred_fallthru
        _
      %p200 = scmp.lt.s32.totalorder %s17, 2
      // Predicated region
      $region25: #{tpu_custom_call.1} parent=5 // pred_check
        %p201 = pneg %p200
      $region26: #{tpu_custom_call.1} parent=5 // pred_check_branch
        %203 = sbr.rel (%p201) target = $region28
      $region27: #{tpu_custom_call.1} parent=5 // pred_region
        // Predicated region
        $region29: #{tpu_custom_call.1} parent=27 // pred_check
          %p204 = pneg %p51
        $region30: #{tpu_custom_call.1} parent=27 // pred_check_branch
          %206 = sbr.rel (%p204) target = $region32
        $region31: #{tpu_custom_call.1} parent=27 // pred_region
          %s207 = sand.u32 %s41, 1
          %s208 = scalar_lea.sflag [#allocation3], %s207
          %s209 = sand.u32 %s41, 1
          %s210 = smul.addr %s209, 16
          %s211 = scalar_lea.vmem [#allocation2], %s210
          %213 = vsyncadd %s208, 0
          %s214 = smul.addr %s24, 2
          %s215 = sadd.s32 %s25, %s214
          %s216 = smul.addr %s215, 8
          %s217 = scalar_lea.hbm %s0, %s216
          %s218 = sshll.u32 %s217, 4
          %s219 = int_to_ptr.hbm [resolvable:$true] %s218
          %s220 = sshll.u32 %s211, 4
          %s221 = int_to_ptr.vmem [resolvable:$true] %s220
          %226 = dma.hbm_to_vmem [thread:$0]  %s219, 256, %s221, %s208, 128, 128, 8
        $region32: #{tpu_custom_call.1} parent=27 // pred_fallthru
          _
        // Predicated region
        $region33: #{tpu_custom_call.1} parent=27 // pred_check
          %p227 = pneg %p79
        $region34: #{tpu_custom_call.1} parent=27 // pred_check_branch
          %229 = sbr.rel (%p227) target = $region36
        $region35: #{tpu_custom_call.1} parent=27 // pred_region
          %p230 = scmp.lt.s32.totalorder %s24, 1
          %s231 = scalar_select %p230, %s24, 1
          %p232 = scmp.lt.s32.totalorder %s25, 0
          %s233 = scalar_select %p232, %s25, 0
          %s234 = sadd.s32 %s233, %s231
          %s235 = smul.addr %s234, 4
          %s236 = scalar_lea.vmem %s1, %s235
        $region36: #{tpu_custom_call.1} parent=27 // pred_fallthru
          _
      $region28: #{tpu_custom_call.1} parent=5 // pred_fallthru
        _
      %p237 = scmp.le.s32.totalorder 1, %s17
      %p238 = scmp.lt.s32.totalorder %s17, 3
      %p239 = pnand %p237, %p238
      %p240 = pneg %p239
      // Predicated region
      $region37: #{tpu_custom_call.1} parent=5 // pred_check
        _
      $region38: #{tpu_custom_call.1} parent=5 // pred_check_branch
        %242 = sbr.rel (%p239) target = $region40
      $region39: #{tpu_custom_call.1} parent=5 // pred_region
        %s243 = ssub.s32 %s17, 1
        %s244 = sand.u32 %s44, 1
        %s245 = scalar_lea.sflag [#allocation3], %s244
        %s246 = sand.u32 %s44, 1
        %s247 = smul.addr %s246, 16
        %s248 = scalar_lea.vmem [#allocation2], %s247
        // Predicated region
        $region41: #{tpu_custom_call.1} parent=39 // pred_check
          %p249 = pneg %p57
        $region42: #{tpu_custom_call.1} parent=39 // pred_check_branch
          %251 = sbr.rel (%p249) target = $region44
        $region43: #{tpu_custom_call.1} parent=39 // pred_region
          %253 = dma.done %s245, 256
        $region44: #{tpu_custom_call.1} parent=39 // pred_fallthru
          _
        %s254 = sand.u32 %s44, 1
        %s255 = scalar_lea.sflag [#allocation3], %s254
        %s256 = sand.u32 %s44, 1
        %s257 = smul.addr %s256, 16
        %s258 = scalar_lea.vmem [#allocation2], %s257
        %p259 = pneg %p57
        %p260 = pneg %p54
        %p261 = scmp.lt.s32.totalorder %s26, 1
        %s262 = scalar_select %p261, %s26, 1
        %p263 = scmp.lt.s32.totalorder %s27, 0
        %s264 = scalar_select %p263, %s27, 0
        %s265 = sadd.s32 %s264, %s262
        %s266 = smul.addr %s265, 4
        %s267 = scalar_lea.vmem %s1, %s266
        %p268 = pneg %p85
        %p269 = pneg %p82
        %p270 = pneg %p106
        %p271 = pneg %p103
        %p272 = pneg %p127
        %p273 = pneg %p124
        %p274 = pneg %p148
        %p275 = pneg %p145
        %p276 = pneg %p176
        %p277 = pneg %p173
        %s278 = sand.u32 %s163, 1
        %s279 = scalar_lea.sflag [#allocation4], %s278
        %s280 = sand.u32 %s163, 1
        %s281 = smul.addr %s280, 4
        %s282 = scalar_lea.vmem [#allocation5], %s281
        %p283 = scmp.lt.s32.totalorder %s26, 1
        %s284 = scalar_select %p283, %s26, 1
        %p285 = scmp.lt.s32.totalorder %s27, 0
        %s286 = scalar_select %p285, %s27, 0
        %s287 = sadd.s32 %s286, %s284
        %s288 = smul.addr %s287, 4
        %s289 = scalar_lea.vmem %s1, %s288
        %v290 = vld [vmem:[%s248] sm:$0xff]
        %v291 = vld [vmem:[%s248 + $0x8] sm:$0xff]
        %v292 = vld [vmem:[%s289] sm:$0x7]
        %v293 = vld [vmem:[%s2] sm:$0xff]
        %v294 = vld [vmem:[%s3] sm:$0xff]
        %296 = vset.pattern.permute.xlu0 0
        %297 = vperm.xlu0 %296, %v294
        %v298 = vpop.permute.xlu0 %297
        %v300 = vperm.slane %v292, 0
        %v301 = vmul.f32 %v298, %v300
        %vm302 = vcmask 130048
        %v304 = vsel %vm302, %v293, 0
        %306 = vmatpush.msra.mxu0 0.0
        %307 = vmatpush.msra.mxu0 0.0
        %308 = vmatpush.msra.mxu0 0.0
        %309 = vmatpush.msra.mxu0 0.0
        %310 = vmatpush.msra.mxu0 0.0
        %311 = vmatpush.msra.mxu0 0.0
        %312 = vmatpush.msra.mxu0 0.0
        %313 = vmatpush.msra.mxu0 0.0
        %314 = vmatpush.msra.mxu0 0.0
        %315 = vmatpush.msra.mxu0 0.0
        %316 = vmatpush.msra.mxu0 0.0
        %317 = vmatpush.msra.mxu0 0.0
        %318 = vmatpush.msra.mxu0 0.0
        %319 = vmatpush.msra.mxu0 0.0
        %320 = vmatpush.msra.mxu0 %v291
        %321 = vmatpush.msra.mxu0 %v290
        %322 = vmatmul.f32.gmra.mxu0 %v304
        %v323 = vpop.f32.mrf.mxu0
        %v324 = vadd.f32 %v301, %v323
        %325 = vdwg.mxu0
        %326 = vset.pattern.permute.xlu0 1
        %327 = vperm.xlu0 %326, %v294
        %v328 = vpop.permute.xlu0 %327
        %v330 = vperm.slane %v292, 1
        %v331 = vmul.f32 %v328, %v330
        %v332 = vadd.f32 %v324, %v331
        %333 = vset.pattern.permute.xlu0 2
        %334 = vperm.xlu0 %333, %v294
        %v335 = vpop.permute.xlu0 %334
        %v337 = vperm.slane %v292, 2
        %v338 = vmul.f32 %v335, %v337
        %v339 = vadd.f32 %v332, %v338
        %v340 = vld [vmem:[%s4] sm:$0xff]
        %342 = vset.pattern.permute.xlu0 0
        %343 = vperm.xlu0 %342, %v340
        %v344 = vpop.permute.xlu0 %343
        %v346 = vadd.f32 %v339, %v344
        %v347 = vpack.c.bf16 %v346, %v346
        %vm348 = vcmask 257024
        %349 = vst.msk [vmem:[%s282] sm:$0xf] %vm348, %v347
        %s350 = sand.u32 %s163, 1
        %s351 = scalar_lea.sflag [#allocation4], %s350
        %s352 = sand.u32 %s163, 1
        %s353 = smul.addr %s352, 4
        %s354 = scalar_lea.vmem [#allocation5], %s353
        // Predicated region
        $region45: #{tpu_custom_call.1} parent=39 // pred_check
          %p355 = pneg %p173
        $region46: #{tpu_custom_call.1} parent=39 // pred_check_branch
          %357 = sbr.rel (%p355) target = $region48
        $region47: #{tpu_custom_call.1} parent=39 // pred_region
          %359 = vsyncadd %s351, 0
          %s360 = sadd.s32 %s27, %s26
          %s361 = smul.addr %s360, 4
          %s362 = scalar_lea.hbm %s5, %s361
          %s364 = sshll.u32 %s354, 4
          %s365 = int_to_ptr.vmem [resolvable:$true] %s364
          %s366 = sshll.u32 %s362, 4
          %s367 = int_to_ptr.hbm [resolvable:$true] %s366
          %369 = dma.vmem_to_hbm [thread:$0]  %s365, 64, %s367, %s351
        $region48: #{tpu_custom_call.1} parent=39 // pred_fallthru
          _
      $region40: #{tpu_custom_call.1} parent=5 // pred_fallthru
        _
      %p370 = scmp.le.s32.totalorder 2, %s17
      // Predicated region
      $region49: #{tpu_custom_call.1} parent=5 // pred_check
        %p371 = pneg %p370
      $region50: #{tpu_custom_call.1} parent=5 // pred_check_branch
        %373 = sbr.rel (%p371) target = $region52
      $region51: #{tpu_custom_call.1} parent=5 // pred_region
        %s374 = ssub.s32 %s17, 2
        // Predicated region
        $region53: #{tpu_custom_call.1} parent=51 // pred_check
          %p375 = pneg %p179
        $region54: #{tpu_custom_call.1} parent=51 // pred_check_branch
          %377 = sbr.rel (%p375) target = $region56
        $region55: #{tpu_custom_call.1} parent=51 // pred_region
          %s378 = sand.u32 %s164, 1
          %s379 = scalar_lea.sflag [#allocation4], %s378
          %s380 = sand.u32 %s164, 1
          %s381 = smul.addr %s380, 4
          %s382 = scalar_lea.vmem [#allocation5], %s381
          %384 = dma.done %s379, 64
        $region56: #{tpu_custom_call.1} parent=51 // pred_fallthru
          _
      $region52: #{tpu_custom_call.1} parent=5 // pred_fallthru
        _
    $region6: #{tpu_custom_call.1} parent=1 // loop_footer
      %s21 = sadd.s32 1, %s17
    $region7: #{tpu_custom_call.1} parent=1 // loop_footer_branch
      %16 = sbr.rel target = $region3
    $region8: #{tpu_custom_call.1} parent=1 // loop_exit
      _
    %385 = vsyncpa [#allocation3], 1
    %s386 = scalar_lea.sflag [#allocation3], 1
    %387 = vsyncpa %s386, 1
    %388 = vsyncpa [#allocation4], 1
    %s389 = scalar_lea.sflag [#allocation4], 1
    %390 = vsyncpa %s389, 1

</llo_original>
